<compile_context>
chip_gen: v7x
topology: tpu7x:2x2x1
jax: 0.10.0
libtpu: 0.0.40
codegen_flags: <defaults>
</compile_context>

<pallas_src>
import functools

import jax
import jax.numpy as jnp
import numpy as np
from jax.experimental import pallas as pl
from jax.experimental.pallas import tpu as pltpu


def _focal_kernel(logits_ref, tgt_ref, alpha_ref, out_ref, *, gamma, smooth):
    """One grid step handles a (C, T) tile: C classes on sublanes, T pixels on lanes.

    logits_ref: (1, C, T)   raw logits (any float dtype; upcast to f32 here)
    tgt_ref:    (1, 1, T)   int32 class index per pixel (-1 marks padded pixels)
    alpha_ref:  (C, 1)      f32 per-class alpha weights (resident)
    out_ref:    (1, 1, 1, 1) f32 partial sum of per-pixel focal losses for this tile
    """
    x = logits_ref[0].astype(jnp.float32)                       # (C, T)
    tgt = tgt_ref[0]                                            # (1, T) int32
    alpha = alpha_ref[...]                                      # (C, 1) f32

    cls = jax.lax.broadcasted_iota(jnp.int32, x.shape, 0)       # (C, T) class ids
    one_hot = (cls == tgt).astype(jnp.float32)                  # (C, T)

    # Softmax prob of the target class (class axis = sublanes), numerically stable.
    m = jnp.max(x, axis=0, keepdims=True)                       # (1, T)
    e = jnp.exp(x - m)                                          # (C, T)
    se = jnp.sum(e, axis=0, keepdims=True)                      # (1, T)
    e_t = jnp.sum(one_hot * e, axis=0, keepdims=True)           # (1, T)
    p_t = e_t / se                                              # (1, T)

    eps = 1e-10
    if smooth is not None:
        # clamp(one_hot, s, 1-s) . softmax  ==  (1-s)*p_t + s*(1 - p_t)
        pt = (1.0 - smooth) * p_t + smooth * (1.0 - p_t) + eps
    else:
        pt = p_t + eps
    logpt = jnp.log(pt)

    # alpha[target]: plain gather (matches the module's `alpha[idx]`, independent
    # of label smoothing).
    alpha_t = jnp.sum(one_hot * alpha, axis=0, keepdims=True)   # (1, T)

    one_minus = 1.0 - pt
    g_int = int(gamma)
    if float(gamma) == float(g_int) and 0 <= g_int <= 16:
        # Integer gamma: repeated multiply instead of pow (avoids EUP log+exp).
        focal = jnp.ones_like(one_minus) if g_int == 0 else one_minus
        for _ in range(max(0, g_int - 1)):
            focal = focal * one_minus
    else:
        focal = jnp.power(one_minus, gamma)

    valid = (tgt >= 0).astype(jnp.float32)                      # mask padded pixels
    loss = -alpha_t * focal * logpt * valid                     # (1, T)
    out_ref[...] = jnp.sum(loss).reshape(1, 1, 1, 1)


def focal_loss(logits_nchw, target, alpha, *, gamma=2.0, smooth=None,
               size_average=True, tile_hw=8192):
    """logits_nchw: (N, C, H, W) float; target: (N, H, W) int; alpha: (C,) float."""
    N, C, H, W = logits_nchw.shape
    HW = H * W
    M = N * HW

    # Natural layout: free reshape only (no transpose, no dtype cast in HBM).
    x = logits_nchw.reshape(N, C, HW)
    t = target.reshape(N, 1, HW).astype(jnp.int32)

    # Pick a lane tile: multiple of 128 pixels, capped so the (double-buffered)
    # logits tiles stay a few MiB -- fits every generation's default scoped VMEM
    # (v5e 16 MiB, v6e/v7x 32 MiB) with headroom.
    budget = 4 * 1024 * 1024
    itemsize = x.dtype.itemsize
    cap = max(128, (budget // max(1, C * itemsize)) // 128 * 128)
    tile = min(int(tile_hw), cap)
    if HW <= tile:
        T = HW                      # whole spatial extent in one tile (full dim OK)
        HWp = HW
    else:
        T = max(128, (tile // 128) * 128)
        HWp = ((HW + T - 1) // T) * T
        if HWp != HW:
            x = jnp.pad(x, ((0, 0), (0, 0), (0, HWp - HW)))
            t = jnp.pad(t, ((0, 0), (0, 0), (0, HWp - HW)), constant_values=-1)
    Gj = HWp // T

    alpha_col = jnp.asarray(alpha, dtype=jnp.float32).reshape(C, 1)

    kernel = functools.partial(
        _focal_kernel, gamma=float(gamma),
        smooth=None if smooth is None else float(smooth))

    partials = pl.pallas_call(
        kernel,
        out_shape=jax.ShapeDtypeStruct((N, Gj, 1, 1), jnp.float32),
        grid_spec=pltpu.PrefetchScalarGridSpec(
            num_scalar_prefetch=0,
            grid=(N, Gj),
            in_specs=[
                pl.BlockSpec((1, C, T), lambda n, j: (n, 0, j)),   # logits tile
                pl.BlockSpec((1, 1, T), lambda n, j: (n, 0, j)),   # target tile
                pl.BlockSpec((C, 1), lambda n, j: (0, 0)),         # alpha (resident)
            ],
            out_specs=pl.BlockSpec((1, 1, 1, 1), lambda n, j: (n, j, 0, 0)),
        ),
        compiler_params=pltpu.CompilerParams(
            dimension_semantics=("parallel", "parallel")),
    )(x, t, alpha_col)

    total = jnp.sum(partials)
    return total / M if size_average else total


def _reference(logits_nchw, target, alpha, gamma=2.0, smooth=None,
               size_average=True):
    """Pure-JAX reference mirroring the PyTorch forward exactly."""
    N, C, H, W = logits_nchw.shape
    sm = jax.nn.softmax(logits_nchw.astype(jnp.float32), axis=1)
    sm = jnp.transpose(sm.reshape(N, C, H * W), (0, 2, 1)).reshape(-1, C)
    t = target.reshape(-1)
    one_hot = jax.nn.one_hot(t, C, dtype=jnp.float32)
    if smooth is not None:
        one_hot = jnp.clip(one_hot, smooth, 1.0 - smooth)
    pt = jnp.sum(one_hot * sm, axis=1) + 1e-10
    logpt = jnp.log(pt)
    a = jnp.asarray(alpha, dtype=jnp.float32)[t]
    loss = -a * jnp.power(1.0 - pt, gamma) * logpt
    return jnp.mean(loss) if size_average else jnp.sum(loss)


if __name__ == "__main__":
    num_class = 4
    N, H, W = 2, 16, 16

    key = jax.random.PRNGKey(0)
    k1, k2 = jax.random.split(key)
    logits = jax.random.normal(k1, (N, num_class, H, W), dtype=jnp.float32)
    target = jax.random.randint(k2, (N, H, W), 0, num_class, dtype=jnp.int32)

    # default module init: alpha = torch.ones(num_class, 1)
    alpha = jnp.ones((num_class,), dtype=jnp.float32)

    # Case 1: default path (gamma=2, no smoothing, mean reduction).
    out = focal_loss(logits, target, alpha, gamma=2.0, smooth=None,
                     size_average=True)
    out = jax.block_until_ready(out)
    ref = _reference(logits, target, alpha, gamma=2.0, smooth=None,
                     size_average=True)
    np.testing.assert_allclose(np.asarray(out), np.asarray(ref),
                               rtol=1e-5, atol=1e-6)

    # Case 2: label smoothing + spatial size not a multiple of the tile
    #         (exercises padding/masking and the multi-tile grid) + sum reduction.
    H2, W2 = 20, 20
    k3, k4 = jax.random.split(k2)
    logits2 = jax.random.normal(k3, (1, num_class, H2, W2), dtype=jnp.float32)
    target2 = jax.random.randint(k4, (1, H2, W2), 0, num_class, dtype=jnp.int32)
    out2 = focal_loss(logits2, target2, alpha, gamma=2.0, smooth=0.1,
                      size_average=False, tile_hw=128)
    out2 = jax.block_until_ready(out2)
    ref2 = _reference(logits2, target2, alpha, gamma=2.0, smooth=0.1,
                      size_average=False)
    np.testing.assert_allclose(np.asarray(out2), np.asarray(ref2),
                               rtol=1e-5, atol=1e-5)

    print("KERNEL_OK")
</pallas_src>

<mosaic_0001>
module attributes {stable_mosaic.version = 11 : i64} {
  func.func @_focal_kernel(%arg0: i32, %arg1: i32, %arg2: memref<1x4x256xf32, #tpu.memory_space<vmem>>, %arg3: memref<1x1x256xi32, #tpu.memory_space<vmem>>, %arg4: memref<4x1xf32, #tpu.memory_space<vmem>>, %arg5: memref<1x1x1x1xf32, #tpu.memory_space<vmem>>) attributes {dimension_semantics = [#tpu.dimension_semantics<parallel>, #tpu.dimension_semantics<parallel>], iteration_bounds = array<i64: 2, 1>, scalar_prefetch = 0 : i64, scratch_operands = 0 : i64, tpu.core_type = #tpu.core_type<tc>, window_params = [{transform_indices = @transform_0, window_bounds = array<i64: 1, 4, 256>}, {transform_indices = @transform_1, window_bounds = array<i64: 1, 1, 256>}, {pipeline_mode = #tpu.pipeline_mode<synchronous>, transform_indices = @transform_2, window_bounds = array<i64: 4, 1>}, {transform_indices = @transform_3, window_bounds = array<i64: 1, 1, 1, 1>}]} {
    %c0 = arith.constant 0 : index
    %c0_0 = arith.constant 0 : index
    %c0_1 = arith.constant 0 : index
    %0 = vector.load %arg2[%c0, %c0_0, %c0_1] : memref<1x4x256xf32, #tpu.memory_space<vmem>>, vector<1x4x256xf32>
    %1 = vector.shape_cast %0 : vector<1x4x256xf32> to vector<4x256xf32>
    %c0_2 = arith.constant 0 : index
    %c0_3 = arith.constant 0 : index
    %c0_4 = arith.constant 0 : index
    %2 = vector.load %arg3[%c0_2, %c0_3, %c0_4] : memref<1x1x256xi32, #tpu.memory_space<vmem>>, vector<1x1x256xi32>
    %3 = vector.shape_cast %2 : vector<1x1x256xi32> to vector<1x256xi32>
    %c0_5 = arith.constant 0 : index
    %c0_6 = arith.constant 0 : index
    %4 = vector.load %arg4[%c0_5, %c0_6] : memref<4x1xf32, #tpu.memory_space<vmem>>, vector<4x1xf32>
    %5 = tpu.iota {dimensions = array<i32: 0>} : vector<4x256xi32>
    %6 = vector.broadcast %3 : vector<1x256xi32> to vector<4x256xi32>
    %7 = arith.cmpi eq, %5, %6 : vector<4x256xi32>
    %8 = arith.extui %7 : vector<4x256xi1> to vector<4x256xi32>
    %9 = arith.sitofp %8 : vector<4x256xi32> to vector<4x256xf32>
    %cst = arith.constant dense<0xFF800000> : vector<256xf32>
    %10 = vector.multi_reduction <maximumf>, %1, %cst [0] : vector<4x256xf32> to vector<256xf32>
    %11 = vector.shape_cast %10 : vector<256xf32> to vector<1x256xf32>
    %12 = vector.broadcast %11 : vector<1x256xf32> to vector<4x256xf32>
    %13 = arith.subf %1, %12 : vector<4x256xf32>
    %14 = math.exp %13 : vector<4x256xf32>
    %cst_7 = arith.constant dense<0.000000e+00> : vector<256xf32>
    %15 = vector.multi_reduction <add>, %14, %cst_7 [0] : vector<4x256xf32> to vector<256xf32>
    %16 = vector.shape_cast %15 : vector<256xf32> to vector<1x256xf32>
    %17 = arith.mulf %9, %14 : vector<4x256xf32>
    %cst_8 = arith.constant dense<0.000000e+00> : vector<256xf32>
    %18 = vector.multi_reduction <add>, %17, %cst_8 [0] : vector<4x256xf32> to vector<256xf32>
    %19 = vector.shape_cast %18 : vector<256xf32> to vector<1x256xf32>
    %20 = arith.divf %19, %16 : vector<1x256xf32>
    %cst_9 = arith.constant 1.000000e-10 : f32
    %21 = vector.broadcast %cst_9 : f32 to vector<1x256xf32>
    %22 = arith.addf %20, %21 : vector<1x256xf32>
    %23 = math.log %22 : vector<1x256xf32>
    %24 = vector.broadcast %4 : vector<4x1xf32> to vector<4x256xf32>
    %25 = arith.mulf %9, %24 : vector<4x256xf32>
    %cst_10 = arith.constant dense<0.000000e+00> : vector<256xf32>
    %26 = vector.multi_reduction <add>, %25, %cst_10 [0] : vector<4x256xf32> to vector<256xf32>
    %27 = vector.shape_cast %26 : vector<256xf32> to vector<1x256xf32>
    %cst_11 = arith.constant 1.000000e+00 : f32
    %28 = vector.broadcast %cst_11 : f32 to vector<1x256xf32>
    %29 = arith.subf %28, %22 : vector<1x256xf32>
    %30 = arith.mulf %29, %29 : vector<1x256xf32>
    %c0_i32 = arith.constant 0 : i32
    %31 = vector.broadcast %c0_i32 : i32 to vector<1x256xi32>
    %32 = arith.cmpi sge, %3, %31 : vector<1x256xi32>
    %33 = arith.extui %32 : vector<1x256xi1> to vector<1x256xi32>
    %34 = arith.sitofp %33 : vector<1x256xi32> to vector<1x256xf32>
    %cst_12 = arith.constant 0.000000e+00 : f32
    %35 = vector.broadcast %cst_12 : f32 to vector<1x256xf32>
    %36 = arith.subf %35, %27 : vector<1x256xf32>
    %37 = arith.mulf %36, %30 : vector<1x256xf32>
    %38 = arith.mulf %37, %23 : vector<1x256xf32>
    %39 = arith.mulf %38, %34 : vector<1x256xf32>
    %40 = vector.shape_cast %39 : vector<1x256xf32> to vector<1x1x256xf32>
    %cst_13 = arith.constant dense<0.000000e+00> : vector<1xf32>
    %41 = vector.multi_reduction <add>, %40, %cst_13 [1, 2] : vector<1x1x256xf32> to vector<1xf32>
    %42 = vector.shape_cast %41 : vector<1xf32> to vector<1x1x1xf32>
    %43 = vector.extract %42[0, 0, 0] : f32 from vector<1x1x1xf32>
    %44 = vector.broadcast %43 : f32 to vector<1x1x1x1xf32>
    %c0_14 = arith.constant 0 : index
    %c0_15 = arith.constant 0 : index
    %c0_16 = arith.constant 0 : index
    %c0_17 = arith.constant 0 : index
    %45 = vector.load %arg5[%c0_14, %c0_15, %c0_16, %c0_17] : memref<1x1x1x1xf32, #tpu.memory_space<vmem>>, vector<1x1x1x1xf32>
    tpu.vector_store %arg5[%c0_14, %c0_15, %c0_16, %c0_17], %44 {strides = array<i32>} : memref<1x1x1x1xf32, #tpu.memory_space<vmem>>, vector<1x1x1x1xf32>,
    return
  }
  func.func @transform_0(%arg0: i32, %arg1: i32) -> (i32, i32, i32) {
    %c0_i32 = arith.constant 0 : i32
    %c0_i32_0 = arith.constant 0 : i32
    return %arg0, %c0_i32, %arg1 : i32, i32, i32
  }
  func.func @transform_1(%arg0: i32, %arg1: i32) -> (i32, i32, i32) {
    %c0_i32 = arith.constant 0 : i32
    %c0_i32_0 = arith.constant 0 : i32
    return %arg0, %c0_i32, %arg1 : i32, i32, i32
  }
  func.func @transform_2(%arg0: i32, %arg1: i32) -> (i32, i32) {
    %c0_i32 = arith.constant 0 : i32
    %c0_i32_0 = arith.constant 0 : i32
    %c0_i32_1 = arith.constant 0 : i32
    return %c0_i32, %c0_i32_0 : i32, i32
  }
  func.func @transform_3(%arg0: i32, %arg1: i32) -> (i32, i32, i32, i32) {
    %c0_i32 = arith.constant 0 : i32
    %c0_i32_0 = arith.constant 0 : i32
    %c0_i32_1 = arith.constant 0 : i32
    return %arg0, %arg1, %c0_i32, %c0_i32_0 : i32, i32, i32, i32
  }
}

</mosaic_0001>

<llo_original>
// kernel: tpu_custom_call.1
$region0: #{tpu_custom_call.1}
  #allocation0 [shape = 'u32[]', space=smem, size = 0x4, offset = 0x4, fixed_abs, tag = 'smem constant byte address 0x4 - core index']
  #allocation1 [shape = 'u32[144,128]{1,0:T(1,128)}', space=vmem, size = 0x12000, scoped, tag = 'internal scratch']
  %s0 = inlined_call_operand.hbm [shape: f32[2,4,256], index: 0, kind: input, shape index: {}]
  %s1 = inlined_call_operand.vmem [shape: s32[2,1,256], index: 1, kind: input, shape index: {}]
  %s2 = inlined_call_operand.vmem [shape: f32[4,1], index: 2, kind: input, shape index: {}]
  %s3 = inlined_call_operand.vmem [shape: f32[2,1,1,1], index: 3, kind: output, shape index: {}]
  %s4 = sld [smem:[#allocation0]]
  $region49: #{tpu_custom_call.1} parent=0
    _
  %s6 = ssub.s32 1, %s4
  %s7 = scalar_select 0, %s6, %s4
  $region1: #{tpu_custom_call.1} parent=0
    #allocation2 [shape = 'u8[8192]{0}', space=vmem, size = 0x2000, scoped, tag = 'input window, operand 0']
    #allocation3 [shape = 's32[2]{0}', space=sflag, size = 0x8, scoped, tag = 'scoped memory for tpu_custom_call.1']
    %8 = vsyncpa [#allocation3], 0
    %s9 = scalar_lea.sflag [#allocation3], 1
    %10 = vsyncpa %s9, 0
    loop: start=0, step=1, limit=4
    $region2: #{tpu_custom_call.1} parent=1 // loop_pre_header
      _
    $region3: #{tpu_custom_call.1} parent=1 // loop_header
      %s12 = sphi 0, %s16
      %p13 = scmp.ge.s32.totalorder %s12, 4
      %s19 = sphi 0, %s31
      %s20 = sphi 0, %s27
      %s21 = sphi 0, %s19
      %s22 = sphi 0, %s20
      %s23 = sphi 0, %s21
      %s24 = sphi 0, %s22
      %s36 = sphi 0, %s38
      %s39 = sphi 0, %s36
      %s40 = sphi 0, %s39
      %s56 = sphi 0, %s40
      %s64 = sphi 0, %s66
      %s67 = sphi 0, %s64
      %s68 = sphi 0, %s67
      %s84 = sphi 0, %s68
      %s88 = sphi 0, %s88
      %s90 = sphi 0, %s88
      %s91 = sphi 0, %s90
      %s105 = sphi 0, %s91
      %s113 = sphi 0, %s115
      %s116 = sphi 0, %s113
      %s117 = sphi 0, %s116
      %s133 = sphi 0, %s117
    $region4: #{tpu_custom_call.1} parent=1 // loop_header_branch
      %15 = sbr.rel (%p13) target = $region8
    $region5: #{tpu_custom_call.1} parent=1 // loop_body
      %s17 = ssub.s32 %s12, 1
      %s18 = ssub.s32 %s12, 2
      %s25 = sadd.s32 1, %s20
      %p26 = scmp.ge.s32.totalorder %s25, 1
      %s27 = scalar_select %p26, 0, %s25
      %s28 = sadd.s32 1, %s19
      %s29 = scalar_select %p26, %s28, %s19
      %p30 = scmp.ge.s32.totalorder %s29, 2
      %s31 = scalar_select %p30, 0, %s29
      %s32 = ssub.s32 %s19, %s31
      %s33 = ssub.s32 %s20, %s27
      %s34 = sor.u32 %s32, %s33
      %p35 = scmp.eq.s32.totalorder %s34, 0
      %s37 = sadd.s32 %s36, 1
      %s38 = scalar_select %p35, %s36, %s37
      %p41 = pneg %p35
      %p42 = scmp.eq.s32.totalorder %s12, 1
      %p43 = por %p41, %p42
      %p44 = scmp.ne.s32.totalorder %s36, %s39
      %p45 = scmp.eq.s32.totalorder %s12, 0
      %p46 = por %p44, %p45
      %p47 = scmp.ne.s32.totalorder %s36, %s39
      %p48 = scmp.eq.s32.totalorder %s17, 1
      %p49 = por %p47, %p48
      %p50 = scmp.ne.s32.totalorder %s39, %s40
      %p51 = scmp.eq.s32.totalorder %s17, 0
      %p52 = por %p50, %p51
      %p53 = scmp.ne.s32.totalorder %s39, %s40
      %p54 = scmp.eq.s32.totalorder %s18, 1
      %p55 = por %p53, %p54
      %p57 = scmp.ne.s32.totalorder %s40, %s56
      %p58 = scmp.eq.s32.totalorder %s18, 0
      %p59 = por %p57, %p58
      %s60 = ssub.s32 %s19, %s31
      %s61 = ssub.s32 %s20, %s27
      %s62 = sor.u32 %s60, %s61
      %p63 = scmp.eq.s32.totalorder %s62, 0
      %s65 = sadd.s32 %s64, 1
      %s66 = scalar_select %p63, %s64, %s65
      %p69 = pneg %p63
      %p70 = scmp.eq.s32.totalorder %s12, 1
      %p71 = por %p69, %p70
      %p72 = scmp.ne.s32.totalorder %s64, %s67
      %p73 = scmp.eq.s32.totalorder %s12, 0
      %p74 = por %p72, %p73
      %p75 = scmp.ne.s32.totalorder %s64, %s67
      %p76 = scmp.eq.s32.totalorder %s17, 1
      %p77 = por %p75, %p76
      %p78 = scmp.ne.s32.totalorder %s67, %s68
      %p79 = scmp.eq.s32.totalorder %s17, 0
      %p80 = por %p78, %p79
      %p81 = scmp.ne.s32.totalorder %s67, %s68
      %p82 = scmp.eq.s32.totalorder %s18, 1
      %p83 = por %p81, %p82
      %p85 = scmp.ne.s32.totalorder %s68, %s84
      %p86 = scmp.eq.s32.totalorder %s18, 0
      %p87 = por %p85, %p86
      %s89 = sadd.s32 %s88, 1
      %p92 = scmp.eq.s32.totalorder %s12, 1
      %p93 = scmp.ne.s32.totalorder %s88, %s90
      %p94 = scmp.eq.s32.totalorder %s12, 0
      %p95 = por %p93, %p94
      %p96 = scmp.ne.s32.totalorder %s88, %s90
      %p97 = scmp.eq.s32.totalorder %s17, 1
      %p98 = por %p96, %p97
      %p99 = scmp.ne.s32.totalorder %s90, %s91
      %p100 = scmp.eq.s32.totalorder %s17, 0
      %p101 = por %p99, %p100
      %p102 = scmp.ne.s32.totalorder %s90, %s91
      %p103 = scmp.eq.s32.totalorder %s18, 1
      %p104 = por %p102, %p103
      %p106 = scmp.ne.s32.totalorder %s91, %s105
      %p107 = scmp.eq.s32.totalorder %s18, 0
      %p108 = por %p106, %p107
      %s109 = ssub.s32 %s19, %s31
      %s110 = ssub.s32 %s20, %s27
      %s111 = sor.u32 %s109, %s110
      %p112 = scmp.eq.s32.totalorder %s111, 0
      %s114 = sadd.s32 %s113, 1
      %s115 = scalar_select %p112, %s113, %s114
      %p118 = pneg %p112
      %p119 = scmp.eq.s32.totalorder %s12, 1
      %p120 = por %p118, %p119
      %p121 = scmp.ne.s32.totalorder %s113, %s116
      %p122 = scmp.eq.s32.totalorder %s12, 0
      %p123 = por %p121, %p122
      %p124 = scmp.ne.s32.totalorder %s113, %s116
      %p125 = scmp.eq.s32.totalorder %s17, 1
      %p126 = por %p124, %p125
      %p127 = scmp.ne.s32.totalorder %s116, %s117
      %p128 = scmp.eq.s32.totalorder %s17, 0
      %p129 = por %p127, %p128
      %p130 = scmp.ne.s32.totalorder %s116, %s117
      %p131 = scmp.eq.s32.totalorder %s18, 1
      %p132 = por %p130, %p131
      %p134 = scmp.ne.s32.totalorder %s117, %s133
      %p135 = scmp.eq.s32.totalorder %s18, 0
      %p136 = por %p134, %p135
      %p137 = scmp.le.s32.totalorder 1, %s12
      %p138 = scmp.lt.s32.totalorder %s12, 3
      %p139 = pnand %p137, %p138
      %p140 = pneg %p139
      // Predicated region
      $region9: #{tpu_custom_call.1} parent=5 // pred_check
        _
      $region10: #{tpu_custom_call.1} parent=5 // pred_check_branch
        %142 = sbr.rel (%p139) target = $region12
      $region11: #{tpu_custom_call.1} parent=5 // pred_region
        %s143 = ssub.s32 %s12, 1
        // Predicated region
        $region13: #{tpu_custom_call.1} parent=11 // pred_check
          %p144 = pneg %p101
        $region14: #{tpu_custom_call.1} parent=11 // pred_check_branch
          %146 = sbr.rel (%p144) target = $region16
        $region15: #{tpu_custom_call.1} parent=11 // pred_region
          _
        $region16: #{tpu_custom_call.1} parent=11 // pred_fallthru
          _
      $region12: #{tpu_custom_call.1} parent=5 // pred_fallthru
        _
      %p147 = scmp.lt.s32.totalorder %s12, 2
      // Predicated region
      $region17: #{tpu_custom_call.1} parent=5 // pred_check
        %p148 = pneg %p147
      $region18: #{tpu_custom_call.1} parent=5 // pred_check_branch
        %150 = sbr.rel (%p148) target = $region20
      $region19: #{tpu_custom_call.1} parent=5 // pred_region
        // Predicated region
        $region21: #{tpu_custom_call.1} parent=19 // pred_check
          %p151 = pneg %p46
        $region22: #{tpu_custom_call.1} parent=19 // pred_check_branch
          %153 = sbr.rel (%p151) target = $region24
        $region23: #{tpu_custom_call.1} parent=19 // pred_region
          %s154 = sand.u32 %s36, 1
          %s155 = scalar_lea.sflag [#allocation3], %s154
          %s156 = sand.u32 %s36, 1
          %s157 = smul.addr %s156, 8
          %s158 = scalar_lea.vmem [#allocation2], %s157
          %s159 = smul.u32 2, %s20
          %s161 = ssub.s32 128, 128
          %162 = vsyncadd %s155, %s161
          %s163 = smul.addr %s19, 2
          %s164 = sadd.s32 %s159, %s163
          %s165 = smul.addr %s164, 64
          %s166 = scalar_lea.hbm %s0, %s165
          %s168 = sshll.u32 %s158, 4
          %s169 = int_to_ptr.vmem [resolvable:$true] %s168
          %171 = dma.hbm_to_vmem [thread:$0]  %s166, 128, %s169, %s155
        $region24: #{tpu_custom_call.1} parent=19 // pred_fallthru
          _
        // Predicated region
        $region25: #{tpu_custom_call.1} parent=19 // pred_check
          %p172 = pneg %p74
        $region26: #{tpu_custom_call.1} parent=19 // pred_check_branch
          %174 = sbr.rel (%p172) target = $region28
        $region27: #{tpu_custom_call.1} parent=19 // pred_region
          %s175 = smul.u32 2, %s20
          %p176 = scmp.lt.s32.totalorder %s19, 1
          %s177 = scalar_select %p176, %s19, 1
          %p178 = scmp.lt.s32.totalorder %s175, 1
          %s179 = scalar_select %p178, %s175, 1
          %s180 = smul.addr %s177, 2
          %s181 = sadd.s32 %s179, %s180
          %s182 = scalar_lea.vmem %s1, %s181
          %s183 = smul.u32 2, %s20
        $region28: #{tpu_custom_call.1} parent=19 // pred_fallthru
          _
      $region20: #{tpu_custom_call.1} parent=5 // pred_fallthru
        _
      %p184 = scmp.le.s32.totalorder 1, %s12
      %p185 = scmp.lt.s32.totalorder %s12, 3
      %p186 = pnand %p184, %p185
      %p187 = pneg %p186
      // Predicated region
      $region29: #{tpu_custom_call.1} parent=5 // pred_check
        _
      $region30: #{tpu_custom_call.1} parent=5 // pred_check_branch
        %189 = sbr.rel (%p186) target = $region32
      $region31: #{tpu_custom_call.1} parent=5 // pred_region
        %s190 = ssub.s32 %s12, 1
        %s191 = sand.u32 %s39, 1
        %s192 = scalar_lea.sflag [#allocation3], %s191
        %s193 = sand.u32 %s39, 1
        %s194 = smul.addr %s193, 8
        %s195 = scalar_lea.vmem [#allocation2], %s194
        // Predicated region
        $region33: #{tpu_custom_call.1} parent=31 // pred_check
          %p196 = pneg %p52
        $region34: #{tpu_custom_call.1} parent=31 // pred_check_branch
          %198 = sbr.rel (%p196) target = $region36
        $region35: #{tpu_custom_call.1} parent=31 // pred_region
          %199 = dma.done %s192, 128
        $region36: #{tpu_custom_call.1} parent=31 // pred_fallthru
          _
        %s200 = sand.u32 %s39, 1
        %s201 = scalar_lea.sflag [#allocation3], %s200
        %s202 = sand.u32 %s39, 1
        %s203 = smul.addr %s202, 8
        %s204 = scalar_lea.vmem [#allocation2], %s203
        %p205 = pneg %p52
        %p206 = pneg %p49
        %s207 = smul.u32 2, %s22
        %p208 = scmp.lt.s32.totalorder %s21, 1
        %s209 = scalar_select %p208, %s21, 1
        %p210 = scmp.lt.s32.totalorder %s207, 1
        %s211 = scalar_select %p210, %s207, 1
        %s212 = smul.addr %s209, 2
        %s213 = sadd.s32 %s211, %s212
        %s214 = scalar_lea.vmem %s1, %s213
        %p215 = pneg %p80
        %p216 = pneg %p77
        %p217 = pneg %p101
        %p218 = pneg %p98
        %p219 = pneg %p129
        %p220 = pneg %p126
        %p221 = scmp.lt.s32.totalorder %s21, 1
        %s222 = scalar_select %p221, %s21, 1
        %p223 = scmp.lt.s32.totalorder %s22, 0
        %s224 = scalar_select %p223, %s22, 0
        %s225 = sadd.s32 %s224, %s222
        %s226 = scalar_lea.vmem %s3, %s225
        %s227 = smul.u32 2, %s22
        %s228 = smul.u32 2, %s22
        %p229 = scmp.lt.s32.totalorder %s21, 1
        %s230 = scalar_select %p229, %s21, 1
        %p231 = scmp.lt.s32.totalorder %s228, 1
        %s232 = scalar_select %p231, %s228, 1
        %s233 = smul.addr %s230, 2
        %s234 = sadd.s32 %s232, %s233
        %s235 = scalar_lea.vmem %s1, %s234
        %s236 = smul.u32 2, %s22
        %p237 = scmp.lt.s32.totalorder %s21, 1
        %s238 = scalar_select %p237, %s21, 1
        %p239 = scmp.lt.s32.totalorder %s22, 0
        %s240 = scalar_select %p239, %s22, 0
        %s241 = sadd.s32 %s240, %s238
        %s242 = scalar_lea.vmem %s3, %s241
        %v243 = vld [vmem:[%s195] sm:$0xff]
        %v244 = vld [vmem:[%s235] sm:$0x3]
        %v245 = vld [vmem:[%s2] sm:$0xf]
        %v246 = vlaneseq
        %v247 = vshrl.u32 %v246, 7
        %v248 = vlaneseq
        %v249 = vshrl.u32 %v248, 7
        %v250 = vsub.s32 0, %v249
        %v251 = vrot.slane %v244, %v250
        %v252 = vlaneseq
        %v253 = vshrl.u32 %v252, 7
        %v254 = vsub.s32 1, %v253
        %v255 = vrot.slane %v244, %v254
        %vm256 = vcmp.eq.s32.totalorder %v247, %v251
        %vm257 = vcmp.eq.s32.totalorder %v247, %v255
        %v258 = vsel %vm256, 1, 0
        %v259 = vsel %vm257, 1, 0
        %v260 = vcvt.s32.f32 %v258
        %v261 = vcvt.s32.f32 %v259
        %v263 = vcombine.high %v243, %v243
        %vm265 = vcmask 1043456
        %v266 = vsel %vm265, %v243, -inf
        %v267 = vrot.slane %v266, 4
        %v268 = vmax.f32 %v266, %v267
        %v269 = vrot.slane %v268, 2
        %v270 = vmax.f32 %v268, %v269
        %v271 = vrot.slane %v270, 1
        %v272 = vmax.f32 %v270, %v271
        %v273 = vsel %vm265, %v263, -inf
        %v274 = vrot.slane %v273, 4
        %v275 = vmax.f32 %v273, %v274
        %v276 = vrot.slane %v275, 2
        %v277 = vmax.f32 %v275, %v276
        %v278 = vrot.slane %v277, 1
        %v279 = vmax.f32 %v277, %v278
        %v282 = vcombine.low %v272, %v279
        %v284 = vsub.f32 %v243, %v282
        %v285 = vmul.f32 %v284, 1.442695
        %v286 = vpow.pop %v285
        %v288 = vcombine.high %v286, %v286
        %v290 = vsel %vm265, %v286, 0.0
        %v291 = vrot.slane %v290, 4
        %v292 = vadd.f32 %v290, %v291
        %v293 = vrot.slane %v292, 2
        %v294 = vadd.f32 %v292, %v293
        %v295 = vrot.slane %v294, 1
        %v296 = vadd.f32 %v294, %v295
        %v297 = vsel %vm265, %v288, 0.0
        %v298 = vrot.slane %v297, 4
        %v299 = vadd.f32 %v297, %v298
        %v300 = vrot.slane %v299, 2
        %v301 = vadd.f32 %v299, %v300
        %v302 = vrot.slane %v301, 1
        %v303 = vadd.f32 %v301, %v302
        %v304 = vmul.f32 %v260, %v286
        %v305 = vmul.f32 %v261, %v288
        %v306 = vsel %vm265, %v304, 0.0
        %v307 = vrot.slane %v306, 4
        %v308 = vadd.f32 %v306, %v307
        %v309 = vrot.slane %v308, 2
        %v310 = vadd.f32 %v308, %v309
        %v311 = vrot.slane %v310, 1
        %v312 = vadd.f32 %v310, %v311
        %v313 = vsel %vm265, %v305, 0.0
        %v314 = vrot.slane %v313, 4
        %v315 = vadd.f32 %v313, %v314
        %v316 = vrot.slane %v315, 2
        %v317 = vadd.f32 %v315, %v316
        %v318 = vrot.slane %v317, 1
        %v319 = vadd.f32 %v317, %v318
        %v320 = vrcp.pop %v296
        %v321 = vmul.f32 %v312, %v320
        %v322 = vrcp.pop %v303
        %v323 = vmul.f32 %v319, %v322
        %v324 = vadd.f32 %v321, 1e-10
        %v325 = vadd.f32 %v323, 1e-10
        %v326 = vlog2.pop %v324
        %v327 = vmul.f32 %v326, 0.6931472
        %v328 = vlog2.pop %v325
        %v329 = vmul.f32 %v328, 0.6931472
        %331 = vset.pattern.permute.xlu0 0
        %332 = vperm.xlu0 %331, %v245
        %v333 = vpop.permute.xlu0 %332
        %v335 = vmul.f32 %v260, %v333
        %v336 = vmul.f32 %v261, %v333
        %v337 = vsel %vm265, %v335, 0.0
        %v338 = vrot.slane %v337, 4
        %v339 = vadd.f32 %v337, %v338
        %v340 = vrot.slane %v339, 2
        %v341 = vadd.f32 %v339, %v340
        %v342 = vrot.slane %v341, 1
        %v343 = vadd.f32 %v341, %v342
        %v344 = vsel %vm265, %v336, 0.0
        %v345 = vrot.slane %v344, 4
        %v346 = vadd.f32 %v344, %v345
        %v347 = vrot.slane %v346, 2
        %v348 = vadd.f32 %v346, %v347
        %v349 = vrot.slane %v348, 1
        %v350 = vadd.f32 %v348, %v349
        %v351 = vsub.f32 1.0, %v324
        %v352 = vsub.f32 1.0, %v325
        %v353 = vmul.f32 %v351, %v351
        %v354 = vmul.f32 %v352, %v352
        %vm355 = vcmp.ge.s32.totalorder %v244, 0
        %v356 = vsel %vm355, 1, 0
        %v357 = vcvt.s32.f32 %v356
        %v358 = vsub.f32 0.0, %v343
        %v359 = vsub.f32 0.0, %v350
        %v360 = vmul.f32 %v358, %v353
        %v361 = vmul.f32 %v359, %v354
        %v362 = vmul.f32 %v360, %v327
        %v363 = vmul.f32 %v361, %v329
        %v365 = vlaneseq
        %v366 = vshrl.u32 %v365, 7
        %v367 = vsub.s32 0, %v366
        %v368 = vrot.slane %v357, %v367
        %v369 = vlaneseq
        %v370 = vshrl.u32 %v369, 7
        %v371 = vsub.s32 1, %v370
        %v372 = vrot.slane %v357, %v371
        %v375 = vmul.f32 %v362, %v368
        %v376 = vmul.f32 %v363, %v372
        %vm377 = vcmask 1040384
        %v378 = vsel %vm377, %v375, 0.0
        %v379 = vsel %vm377, %v376, 0.0
        %v380 = vadd.f32 %v378, %v379
        %381 = vadd.xlane.f32.xlu0 %v380
        %v382 = vpop.xlane.xlu0 %381
        %v383 = vrot.slane %v382, 4
        %v384 = vadd.f32 %v382, %v383
        %v385 = vrot.slane %v384, 2
        %v386 = vadd.f32 %v384, %v385
        %v387 = vrot.slane %v386, 1
        %v388 = vadd.f32 %v386, %v387
        %s389 = vtos %v388
        %v390 = vstv %s389
        %vm391 = vcmask 0
        %392 = vst.msk [vmem:[%s242] sm:$0x1] %vm391, %v390
        %p393 = scmp.lt.s32.totalorder %s21, 1
        %s394 = scalar_select %p393, %s21, 1
        %p395 = scmp.lt.s32.totalorder %s22, 0
        %s396 = scalar_select %p395, %s22, 0
        %s397 = sadd.s32 %s396, %s394
        %s398 = scalar_lea.vmem %s3, %s397
        // Predicated region
        $region37: #{tpu_custom_call.1} parent=31 // pred_check
          %p399 = pneg %p126
        $region38: #{tpu_custom_call.1} parent=31 // pred_check_branch
          %401 = sbr.rel (%p399) target = $region40
        $region39: #{tpu_custom_call.1} parent=31 // pred_region
          _
        $region40: #{tpu_custom_call.1} parent=31 // pred_fallthru
          _
      $region32: #{tpu_custom_call.1} parent=5 // pred_fallthru
        _
      %p402 = scmp.le.s32.totalorder 2, %s12
      // Predicated region
      $region41: #{tpu_custom_call.1} parent=5 // pred_check
        %p403 = pneg %p402
      $region42: #{tpu_custom_call.1} parent=5 // pred_check_branch
        %405 = sbr.rel (%p403) target = $region44
      $region43: #{tpu_custom_call.1} parent=5 // pred_region
        %s406 = ssub.s32 %s12, 2
        // Predicated region
        $region45: #{tpu_custom_call.1} parent=43 // pred_check
          %p407 = pneg %p132
        $region46: #{tpu_custom_call.1} parent=43 // pred_check_branch
          %409 = sbr.rel (%p407) target = $region48
        $region47: #{tpu_custom_call.1} parent=43 // pred_region
          %p410 = scmp.lt.s32.totalorder %s23, 1
          %s411 = scalar_select %p410, %s23, 1
          %p412 = scmp.lt.s32.totalorder %s24, 0
          %s413 = scalar_select %p412, %s24, 0
          %s414 = sadd.s32 %s413, %s411
          %s415 = scalar_lea.vmem %s3, %s414
        $region48: #{tpu_custom_call.1} parent=43 // pred_fallthru
          _
      $region44: #{tpu_custom_call.1} parent=5 // pred_fallthru
        _
    $region6: #{tpu_custom_call.1} parent=1 // loop_footer
      %s16 = sadd.s32 1, %s12
    $region7: #{tpu_custom_call.1} parent=1 // loop_footer_branch
      %11 = sbr.rel target = $region3
    $region8: #{tpu_custom_call.1} parent=1 // loop_exit
      _
    %416 = vsyncpa [#allocation3], 1
    %s417 = scalar_lea.sflag [#allocation3], 1
    %418 = vsyncpa %s417, 1

</llo_original>
